<compile_context>
chip_gen: v7x
topology: tpu7x:2x2x1
jax: 0.10.0
libtpu: 0.0.40
codegen_flags: <defaults>
</compile_context>

<pallas_src>
import functools

import jax
import jax.numpy as jnp
from jax.experimental import pallas as pl
from jax.experimental.pallas import tpu as pltpu


# ----------------------------------------------------------------------------
# Fused sin/cos with a single shared range reduction (f32, Cephes constants).
# ----------------------------------------------------------------------------
_TWO_OVER_PI = 0.6366197723675814
# Cody-Waite split of pi/2 (2x the classic Cephes DP1/DP2/DP3 for pi/4);
# the hi/mid parts have trailing-zero mantissas so k*const stays exact in f32.
_PIO2_HI = 1.5703125
_PIO2_MID = 4.837512969970703125e-4
_PIO2_LO = 7.54978995489188e-8

_S1, _S2, _S3 = -1.6666654611e-1, 8.3321608736e-3, -1.9515295891e-4
_C1, _C2, _C3 = 4.166664568298827e-2, -1.388731625493765e-3, 2.443315711809948e-5


def _sincos(x):
    """Return (sin(x), cos(x)) sharing one range reduction. x: f32 array."""
    k = jnp.round(x * _TWO_OVER_PI)
    r = x - k * _PIO2_HI
    r = r - k * _PIO2_MID
    r = r - k * _PIO2_LO
    r2 = r * r
    sin_r = r + r * r2 * (_S1 + r2 * (_S2 + r2 * _S3))
    cos_r = 1.0 - 0.5 * r2 + r2 * r2 * (_C1 + r2 * (_C2 + r2 * _C3))

    n = k.astype(jnp.int32) & 3
    swap = (n & 1) == 1
    s = jnp.where(swap, cos_r, sin_r)
    c = jnp.where(swap, sin_r, cos_r)
    s = jnp.where((n & 2) == 2, -s, s)
    c = jnp.where(((n + 1) & 2) == 2, -c, c)
    return s, c


# ----------------------------------------------------------------------------
# Kernel
# ----------------------------------------------------------------------------
def _pos_emb_kernel(pos_ref, inv_ref, out_ref, *, half):
    # pos_ref: [TILE_L, 1] f32, inv_ref: [1, H] f32, out_ref: [TILE_L, 2H] f32
    sinusoid = pos_ref[...] * inv_ref[...]          # outer product via VPU broadcast
    s, c = _sincos(sinusoid)
    out_ref[:, :half] = s                           # sin half  (no concat copy)
    out_ref[:, half:] = c                           # cos half


def _round_up(x: int, m: int) -> int:
    return ((x + m - 1) // m) * m


def positional_embedding(pos_seq: jax.Array, inv_freq: jax.Array,
                         *, tile_l: int = 512) -> jax.Array:
    """pos_seq: [L] f32, inv_freq: [demb//2] f32 -> [L, demb] f32."""
    L = pos_seq.shape[0]
    H = inv_freq.shape[0]
    demb = 2 * H

    # Sublane-align the tile (multiple of 8), don't exceed the (padded) length.
    # tile_l=512 keeps the per-step footprint small enough for v7x's 64 MiB
    # VMEM even at large demb while still amortizing per-step overhead.
    tile_l = max(8, min(_round_up(tile_l, 8), _round_up(L, 8)))
    L_pad = _round_up(L, tile_l)
    num_tiles = L_pad // tile_l

    pos_2d = jnp.pad(pos_seq.astype(jnp.float32), (0, L_pad - L)).reshape(L_pad, 1)
    inv_2d = inv_freq.astype(jnp.float32).reshape(1, H)

    out = pl.pallas_call(
        functools.partial(_pos_emb_kernel, half=H),
        out_shape=jax.ShapeDtypeStruct((L_pad, demb), jnp.float32),
        grid=(num_tiles,),
        in_specs=[
            pl.BlockSpec((tile_l, 1), lambda i: (i, 0)),
            pl.BlockSpec((1, H), lambda i: (0, 0)),
        ],
        out_specs=pl.BlockSpec((tile_l, demb), lambda i: (i, 0)),
        compiler_params=pltpu.CompilerParams(
            dimension_semantics=("parallel",),   # shard row tiles across TCs (v7x)
        ),
        cost_estimate=pl.CostEstimate(
            flops=12 * L_pad * demb,             # shared reduction + two polys
            transcendentals=0,
            bytes_accessed=(L_pad * 1 + H + L_pad * demb) * 4,
        ),
    )(pos_2d, inv_2d)
    return out[:L]


def make_inv_freq(demb: int) -> jax.Array:
    # Matches: 1 / 10000 ** (torch.arange(0.0, demb, 2.0) / demb)
    return 1.0 / (10000.0 ** (jnp.arange(0.0, demb, 2.0, dtype=jnp.float32) / demb))


if __name__ == "__main__":
    demb = 256   # H = 128 -> both output halves are lane-dense (multiple of 128)
    L = 40       # not a multiple of the tile -> exercises the padded last tile

    key = jax.random.PRNGKey(0)
    # Typical usage: a (reversed / offset) float position sequence.
    pos_seq = (jnp.arange(L, dtype=jnp.float32)[::-1]
               + jax.random.uniform(key, (L,), jnp.float32))
    inv_freq = make_inv_freq(demb)

    # Small tile so the demo actually runs a multi-step grid (3 tiles of 16).
    out = positional_embedding(pos_seq, inv_freq, tile_l=16)
    out = jax.block_until_ready(out)

    # Pure-JAX reference check.
    sinusoid_ref = pos_seq[:, None] * inv_freq[None, :]
    ref = jnp.concatenate([jnp.sin(sinusoid_ref), jnp.cos(sinusoid_ref)], axis=-1)
    assert out.shape == (L, demb)
    max_err = float(jnp.max(jnp.abs(out - ref)))
    assert jnp.allclose(out, ref, atol=1e-5, rtol=1e-5), max_err

    print("KERNEL_OK")
</pallas_src>

<mosaic_0001>
module attributes {stable_mosaic.version = 11 : i64} {
  func.func @_pos_emb_kernel(%arg0: i32, %arg1: memref<16x1xf32, #tpu.memory_space<vmem>>, %arg2: memref<1x128xf32, #tpu.memory_space<vmem>>, %arg3: memref<16x256xf32, #tpu.memory_space<vmem>>) attributes {dimension_semantics = [#tpu.dimension_semantics<parallel>], iteration_bounds = array<i64: 3>, scalar_prefetch = 0 : i64, scratch_operands = 0 : i64, tpu.core_type = #tpu.core_type<tc>, window_params = [{transform_indices = @transform_0, window_bounds = array<i64: 16, 1>}, {pipeline_mode = #tpu.pipeline_mode<synchronous>, transform_indices = @transform_1, window_bounds = array<i64: 1, 128>}, {transform_indices = @transform_2, window_bounds = array<i64: 16, 256>}]} {
    %c0 = arith.constant 0 : index
    %c0_0 = arith.constant 0 : index
    %0 = vector.load %arg1[%c0, %c0_0] : memref<16x1xf32, #tpu.memory_space<vmem>>, vector<16x1xf32>
    %c0_1 = arith.constant 0 : index
    %c0_2 = arith.constant 0 : index
    %1 = vector.load %arg2[%c0_1, %c0_2] : memref<1x128xf32, #tpu.memory_space<vmem>>, vector<1x128xf32>
    %2 = vector.broadcast %0 : vector<16x1xf32> to vector<16x128xf32>
    %3 = vector.broadcast %1 : vector<1x128xf32> to vector<16x128xf32>
    %4 = arith.mulf %2, %3 : vector<16x128xf32>
    %cst = arith.constant 0.636619746 : f32
    %5 = vector.broadcast %cst : f32 to vector<16x128xf32>
    %6 = arith.mulf %4, %5 : vector<16x128xf32>
    %7 = math.roundeven %6 : vector<16x128xf32>
    %cst_3 = arith.constant 1.5703125 : f32
    %8 = vector.broadcast %cst_3 : f32 to vector<16x128xf32>
    %9 = arith.mulf %7, %8 : vector<16x128xf32>
    %10 = arith.subf %4, %9 : vector<16x128xf32>
    %cst_4 = arith.constant 4.83751297E-4 : f32
    %11 = vector.broadcast %cst_4 : f32 to vector<16x128xf32>
    %12 = arith.mulf %7, %11 : vector<16x128xf32>
    %13 = arith.subf %10, %12 : vector<16x128xf32>
    %cst_5 = arith.constant 7.549790e-08 : f32
    %14 = vector.broadcast %cst_5 : f32 to vector<16x128xf32>
    %15 = arith.mulf %7, %14 : vector<16x128xf32>
    %16 = arith.subf %13, %15 : vector<16x128xf32>
    %17 = arith.mulf %16, %16 : vector<16x128xf32>
    %18 = arith.mulf %16, %17 : vector<16x128xf32>
    %cst_6 = arith.constant -1.95152956E-4 : f32
    %19 = vector.broadcast %cst_6 : f32 to vector<16x128xf32>
    %20 = arith.mulf %17, %19 : vector<16x128xf32>
    %cst_7 = arith.constant 0.00833216123 : f32
    %21 = vector.broadcast %cst_7 : f32 to vector<16x128xf32>
    %22 = arith.addf %21, %20 : vector<16x128xf32>
    %23 = arith.mulf %17, %22 : vector<16x128xf32>
    %cst_8 = arith.constant -0.166666552 : f32
    %24 = vector.broadcast %cst_8 : f32 to vector<16x128xf32>
    %25 = arith.addf %24, %23 : vector<16x128xf32>
    %26 = arith.mulf %18, %25 : vector<16x128xf32>
    %27 = arith.addf %16, %26 : vector<16x128xf32>
    %cst_9 = arith.constant 5.000000e-01 : f32
    %28 = vector.broadcast %cst_9 : f32 to vector<16x128xf32>
    %29 = arith.mulf %28, %17 : vector<16x128xf32>
    %cst_10 = arith.constant 1.000000e+00 : f32
    %30 = vector.broadcast %cst_10 : f32 to vector<16x128xf32>
    %31 = arith.subf %30, %29 : vector<16x128xf32>
    %32 = arith.mulf %17, %17 : vector<16x128xf32>
    %cst_11 = arith.constant 2.44331568E-5 : f32
    %33 = vector.broadcast %cst_11 : f32 to vector<16x128xf32>
    %34 = arith.mulf %17, %33 : vector<16x128xf32>
    %cst_12 = arith.constant -0.00138873165 : f32
    %35 = vector.broadcast %cst_12 : f32 to vector<16x128xf32>
    %36 = arith.addf %35, %34 : vector<16x128xf32>
    %37 = arith.mulf %17, %36 : vector<16x128xf32>
    %cst_13 = arith.constant 0.0416666456 : f32
    %38 = vector.broadcast %cst_13 : f32 to vector<16x128xf32>
    %39 = arith.addf %38, %37 : vector<16x128xf32>
    %40 = arith.mulf %32, %39 : vector<16x128xf32>
    %41 = arith.addf %31, %40 : vector<16x128xf32>
    %42 = arith.fptosi %7 : vector<16x128xf32> to vector<16x128xi32>
    %c3_i32 = arith.constant 3 : i32
    %43 = vector.broadcast %c3_i32 : i32 to vector<16x128xi32>
    %44 = arith.andi %42, %43 : vector<16x128xi32>
    %c1_i32 = arith.constant 1 : i32
    %45 = vector.broadcast %c1_i32 : i32 to vector<16x128xi32>
    %46 = arith.andi %44, %45 : vector<16x128xi32>
    %c1_i32_14 = arith.constant 1 : i32
    %47 = vector.broadcast %c1_i32_14 : i32 to vector<16x128xi32>
    %48 = arith.cmpi eq, %46, %47 : vector<16x128xi32>
    %49 = arith.select %48, %41, %27 : vector<16x128xi1>, vector<16x128xf32>
    %50 = arith.select %48, %27, %41 : vector<16x128xi1>, vector<16x128xf32>
    %c2_i32 = arith.constant 2 : i32
    %51 = vector.broadcast %c2_i32 : i32 to vector<16x128xi32>
    %52 = arith.andi %44, %51 : vector<16x128xi32>
    %c2_i32_15 = arith.constant 2 : i32
    %53 = vector.broadcast %c2_i32_15 : i32 to vector<16x128xi32>
    %54 = arith.cmpi eq, %52, %53 : vector<16x128xi32>
    %cst_16 = arith.constant 0.000000e+00 : f32
    %55 = vector.broadcast %cst_16 : f32 to vector<16x128xf32>
    %56 = arith.subf %55, %49 : vector<16x128xf32>
    %57 = arith.select %54, %56, %49 : vector<16x128xi1>, vector<16x128xf32>
    %c1_i32_17 = arith.constant 1 : i32
    %58 = vector.broadcast %c1_i32_17 : i32 to vector<16x128xi32>
    %59 = arith.addi %44, %58 : vector<16x128xi32>
    %c2_i32_18 = arith.constant 2 : i32
    %60 = vector.broadcast %c2_i32_18 : i32 to vector<16x128xi32>
    %61 = arith.andi %59, %60 : vector<16x128xi32>
    %c2_i32_19 = arith.constant 2 : i32
    %62 = vector.broadcast %c2_i32_19 : i32 to vector<16x128xi32>
    %63 = arith.cmpi eq, %61, %62 : vector<16x128xi32>
    %cst_20 = arith.constant 0.000000e+00 : f32
    %64 = vector.broadcast %cst_20 : f32 to vector<16x128xf32>
    %65 = arith.subf %64, %50 : vector<16x128xf32>
    %66 = arith.select %63, %65, %50 : vector<16x128xi1>, vector<16x128xf32>
    %c0_21 = arith.constant 0 : index
    %c0_22 = arith.constant 0 : index
    %67 = vector.load %arg3[%c0_21, %c0_22] : memref<16x256xf32, #tpu.memory_space<vmem>>, vector<16x128xf32>
    tpu.vector_store %arg3[%c0_21, %c0_22], %57 {strides = array<i32>} : memref<16x256xf32, #tpu.memory_space<vmem>>, vector<16x128xf32>,
    %c0_23 = arith.constant 0 : index
    %c128 = arith.constant 128 : index
    %68 = vector.load %arg3[%c0_23, %c128] : memref<16x256xf32, #tpu.memory_space<vmem>>, vector<16x128xf32>
    tpu.vector_store %arg3[%c0_23, %c128], %66 {strides = array<i32>} : memref<16x256xf32, #tpu.memory_space<vmem>>, vector<16x128xf32>,
    return
  }
  func.func @transform_0(%arg0: i32) -> (i32, i32) {
    %c0_i32 = arith.constant 0 : i32
    %c0_i32_0 = arith.constant 0 : i32
    return %arg0, %c0_i32 : i32, i32
  }
  func.func @transform_1(%arg0: i32) -> (i32, i32) {
    %c0_i32 = arith.constant 0 : i32
    %c0_i32_0 = arith.constant 0 : i32
    %c0_i32_1 = arith.constant 0 : i32
    return %c0_i32, %c0_i32_0 : i32, i32
  }
  func.func @transform_2(%arg0: i32) -> (i32, i32) {
    %c0_i32 = arith.constant 0 : i32
    %c0_i32_0 = arith.constant 0 : i32
    return %arg0, %c0_i32 : i32, i32
  }
}

</mosaic_0001>

<llo_original>
// kernel: tpu_custom_call.1
$region0: #{tpu_custom_call.1}
  #allocation0 [shape = 'u32[]', space=smem, size = 0x4, offset = 0x4, fixed_abs, tag = 'smem constant byte address 0x4 - core index']
  #allocation1 [shape = 'u32[144,128]{1,0:T(1,128)}', space=vmem, size = 0x12000, scoped, tag = 'internal scratch']
  %s0 = inlined_call_operand.vmem [shape: f32[48,1], index: 0, kind: input, shape index: {}]
  %s1 = inlined_call_operand.vmem [shape: f32[1,128], index: 1, kind: input, shape index: {}]
  %s2 = inlined_call_operand.hbm [shape: f32[48,256], index: 2, kind: output, shape index: {}]
  %s3 = sld [smem:[#allocation0]]
  $region41: #{tpu_custom_call.1} parent=0
    _
  %s5 = ssub.s32 1, %s3
  %s6 = scalar_select 0, %s5, %s3
  $region1: #{tpu_custom_call.1} parent=0
    #allocation2 [shape = 'u8[32768]{0}', space=vmem, size = 0x8000, scoped, tag = 'output window, operand 0']
    #allocation3 [shape = 's32[2]{0}', space=sflag, size = 0x8, scoped, tag = 'scoped memory for tpu_custom_call.1']
    %7 = vsyncpa [#allocation3], 0
    %s8 = scalar_lea.sflag [#allocation3], 1
    %9 = vsyncpa %s8, 0
    loop: start=0, step=1, limit=5
    $region2: #{tpu_custom_call.1} parent=1 // loop_pre_header
      _
    $region3: #{tpu_custom_call.1} parent=1 // loop_header
      %s11 = sphi 0, %s15
      %p12 = scmp.ge.s32.totalorder %s11, 5
      %s21 = sphi 0, %s23
      %s24 = sphi 0, %s21
      %s25 = sphi 0, %s24
      %s41 = sphi 0, %s25
      %s45 = sphi 0, %s45
      %s47 = sphi 0, %s45
      %s48 = sphi 0, %s47
      %s62 = sphi 0, %s48
      %s68 = sphi 0, %s70
      %s71 = sphi 0, %s68
      %s72 = sphi 0, %s71
      %s88 = sphi 0, %s72
    $region4: #{tpu_custom_call.1} parent=1 // loop_header_branch
      %14 = sbr.rel (%p12) target = $region8
    $region5: #{tpu_custom_call.1} parent=1 // loop_body
      %s16 = ssub.s32 %s11, 1
      %s17 = ssub.s32 %s11, 2
      %s18 = sadd.s32 %s11, 1
      %s19 = ssub.s32 %s11, %s18
      %p20 = scmp.eq.s32.totalorder %s19, 0
      %s22 = sadd.s32 %s21, 1
      %s23 = scalar_select %p20, %s21, %s22
      %p26 = pneg %p20
      %p27 = scmp.eq.s32.totalorder %s11, 2
      %p28 = por %p26, %p27
      %p29 = scmp.ne.s32.totalorder %s21, %s24
      %p30 = scmp.eq.s32.totalorder %s11, 0
      %p31 = por %p29, %p30
      %p32 = scmp.ne.s32.totalorder %s21, %s24
      %p33 = scmp.eq.s32.totalorder %s16, 2
      %p34 = por %p32, %p33
      %p35 = scmp.ne.s32.totalorder %s24, %s25
      %p36 = scmp.eq.s32.totalorder %s16, 0
      %p37 = por %p35, %p36
      %p38 = scmp.ne.s32.totalorder %s24, %s25
      %p39 = scmp.eq.s32.totalorder %s17, 2
      %p40 = por %p38, %p39
      %p42 = scmp.ne.s32.totalorder %s25, %s41
      %p43 = scmp.eq.s32.totalorder %s17, 0
      %p44 = por %p42, %p43
      %s46 = sadd.s32 %s45, 1
      %p49 = scmp.eq.s32.totalorder %s11, 2
      %p50 = scmp.ne.s32.totalorder %s45, %s47
      %p51 = scmp.eq.s32.totalorder %s11, 0
      %p52 = por %p50, %p51
      %p53 = scmp.ne.s32.totalorder %s45, %s47
      %p54 = scmp.eq.s32.totalorder %s16, 2
      %p55 = por %p53, %p54
      %p56 = scmp.ne.s32.totalorder %s47, %s48
      %p57 = scmp.eq.s32.totalorder %s16, 0
      %p58 = por %p56, %p57
      %p59 = scmp.ne.s32.totalorder %s47, %s48
      %p60 = scmp.eq.s32.totalorder %s17, 2
      %p61 = por %p59, %p60
      %p63 = scmp.ne.s32.totalorder %s48, %s62
      %p64 = scmp.eq.s32.totalorder %s17, 0
      %p65 = por %p63, %p64
      %s66 = ssub.s32 %s11, %s18
      %p67 = scmp.eq.s32.totalorder %s66, 0
      %s69 = sadd.s32 %s68, 1
      %s70 = scalar_select %p67, %s68, %s69
      %p73 = pneg %p67
      %p74 = scmp.eq.s32.totalorder %s11, 2
      %p75 = por %p73, %p74
      %p76 = scmp.ne.s32.totalorder %s68, %s71
      %p77 = scmp.eq.s32.totalorder %s11, 0
      %p78 = por %p76, %p77
      %p79 = scmp.ne.s32.totalorder %s68, %s71
      %p80 = scmp.eq.s32.totalorder %s16, 2
      %p81 = por %p79, %p80
      %p82 = scmp.ne.s32.totalorder %s71, %s72
      %p83 = scmp.eq.s32.totalorder %s16, 0
      %p84 = por %p82, %p83
      %p85 = scmp.ne.s32.totalorder %s71, %s72
      %p86 = scmp.eq.s32.totalorder %s17, 2
      %p87 = por %p85, %p86
      %p89 = scmp.ne.s32.totalorder %s72, %s88
      %p90 = scmp.eq.s32.totalorder %s17, 0
      %p91 = por %p89, %p90
      %p92 = scmp.le.s32.totalorder 1, %s11
      %p93 = scmp.lt.s32.totalorder %s11, 4
      %p94 = pnand %p92, %p93
      %p95 = pneg %p94
      // Predicated region
      $region9: #{tpu_custom_call.1} parent=5 // pred_check
        _
      $region10: #{tpu_custom_call.1} parent=5 // pred_check_branch
        %97 = sbr.rel (%p94) target = $region12
      $region11: #{tpu_custom_call.1} parent=5 // pred_region
        %s98 = ssub.s32 %s11, 1
        // Predicated region
        $region13: #{tpu_custom_call.1} parent=11 // pred_check
          %p99 = pneg %p58
        $region14: #{tpu_custom_call.1} parent=11 // pred_check_branch
          %101 = sbr.rel (%p99) target = $region16
        $region15: #{tpu_custom_call.1} parent=11 // pred_region
          _
        $region16: #{tpu_custom_call.1} parent=11 // pred_fallthru
          _
      $region12: #{tpu_custom_call.1} parent=5 // pred_fallthru
        _
      %p102 = scmp.lt.s32.totalorder %s11, 3
      // Predicated region
      $region17: #{tpu_custom_call.1} parent=5 // pred_check
        %p103 = pneg %p102
      $region18: #{tpu_custom_call.1} parent=5 // pred_check_branch
        %105 = sbr.rel (%p103) target = $region20
      $region19: #{tpu_custom_call.1} parent=5 // pred_region
        // Predicated region
        $region21: #{tpu_custom_call.1} parent=19 // pred_check
          %p106 = pneg %p31
        $region22: #{tpu_custom_call.1} parent=19 // pred_check_branch
          %108 = sbr.rel (%p106) target = $region24
        $region23: #{tpu_custom_call.1} parent=19 // pred_region
          %s109 = smul.u32 2, %s11
          %p110 = scmp.lt.s32.totalorder %s109, 5
          %s111 = scalar_select %p110, %s109, 5
          %s112 = smul.addr %s111, 8
          %s113 = scalar_lea.vmem %s0, %s112
          %s114 = smul.u32 2, %s11
        $region24: #{tpu_custom_call.1} parent=19 // pred_fallthru
          _
      $region20: #{tpu_custom_call.1} parent=5 // pred_fallthru
        _
      %p115 = scmp.le.s32.totalorder 1, %s11
      %p116 = scmp.lt.s32.totalorder %s11, 4
      %p117 = pnand %p115, %p116
      %p118 = pneg %p117
      // Predicated region
      $region25: #{tpu_custom_call.1} parent=5 // pred_check
        _
      $region26: #{tpu_custom_call.1} parent=5 // pred_check_branch
        %120 = sbr.rel (%p117) target = $region28
      $region27: #{tpu_custom_call.1} parent=5 // pred_region
        %s121 = ssub.s32 %s11, 1
        %s122 = smul.u32 2, %s16
        %p123 = scmp.lt.s32.totalorder %s122, 5
        %s124 = scalar_select %p123, %s122, 5
        %s125 = smul.addr %s124, 8
        %s126 = scalar_lea.vmem %s0, %s125
        %p127 = pneg %p37
        %p128 = pneg %p34
        %p129 = pneg %p58
        %p130 = pneg %p55
        %p131 = pneg %p84
        %p132 = pneg %p81
        %s133 = sand.u32 %s71, 1
        %s134 = scalar_lea.sflag [#allocation3], %s133
        %s135 = sand.u32 %s71, 1
        %s136 = smul.addr %s135, 32
        %s137 = scalar_lea.vmem [#allocation2], %s136
        %s138 = smul.u32 2, %s16
        %p139 = scmp.lt.s32.totalorder %s138, 5
        %s140 = scalar_select %p139, %s138, 5
        %s141 = smul.addr %s140, 8
        %s142 = scalar_lea.vmem %s0, %s141
        %s143 = smul.u32 2, %s16
        %s144 = smul.u32 2, %s16
        %v145 = vld [vmem:[%s142] sm:$0xff]
        %v146 = vld [vmem:[%s142 + $0x8] sm:$0xff]
        %v147 = vld [vmem:[%s1] sm:$0x1]
        %149 = vset.pattern.permute.xlu0 0
        %150 = vperm.xlu0 %149, %v145
        %v151 = vpop.permute.xlu0 %150
        %154 = vset.pattern.permute.xlu0 0
        %155 = vperm.xlu0 %154, %v146
        %v156 = vpop.permute.xlu0 %155
        %v159 = vlaneseq
        %v160 = vshrl.u32 %v159, 7
        %v161 = vsub.s32 0, %v160
        %v162 = vrot.slane %v147, %v161
        %v164 = vmul.f32 %v151, %v162
        %v165 = vmul.f32 %v156, %v162
        %v166 = vmul.f32 %v164, 0.63661975
        %v167 = vmul.f32 %v165, 0.63661975
        %v168 = vround.ne.pseudo %v166
        %v169 = vround.ne.pseudo %v167
        %v170 = vmul.f32 %v168, 1.5703125
        %v171 = vmul.f32 %v169, 1.5703125
        %v172 = vsub.f32 %v164, %v170
        %v173 = vsub.f32 %v165, %v171
        %v174 = vmul.f32 %v168, 0.0004837513
        %v175 = vmul.f32 %v169, 0.0004837513
        %v176 = vsub.f32 %v172, %v174
        %v177 = vsub.f32 %v173, %v175
        %v178 = vmul.f32 %v168, 7.54979e-08
        %v179 = vmul.f32 %v169, 7.54979e-08
        %v180 = vsub.f32 %v176, %v178
        %v181 = vsub.f32 %v177, %v179
        %v182 = vmul.f32 %v180, %v180
        %v183 = vmul.f32 %v181, %v181
        %v184 = vmul.f32 %v180, %v182
        %v185 = vmul.f32 %v181, %v183
        %v186 = vmul.f32 %v182, -0.00019515296
        %v187 = vmul.f32 %v183, -0.00019515296
        %v188 = vadd.f32 %v186, 0.008332161
        %v189 = vadd.f32 %v187, 0.008332161
        %v190 = vmul.f32 %v182, %v188
        %v191 = vmul.f32 %v183, %v189
        %v192 = vadd.f32 %v190, -0.16666655
        %v193 = vadd.f32 %v191, -0.16666655
        %v194 = vmul.f32 %v184, %v192
        %v195 = vmul.f32 %v185, %v193
        %v196 = vadd.f32 %v180, %v194
        %v197 = vadd.f32 %v181, %v195
        %v198 = vmul.f32 %v182, 0.5
        %v199 = vmul.f32 %v183, 0.5
        %v200 = vsub.f32 1.0, %v198
        %v201 = vsub.f32 1.0, %v199
        %v202 = vmul.f32 %v182, %v182
        %v203 = vmul.f32 %v183, %v183
        %v204 = vmul.f32 %v182, 2.4433157e-05
        %v205 = vmul.f32 %v183, 2.4433157e-05
        %v206 = vadd.f32 %v204, -0.0013887316
        %v207 = vadd.f32 %v205, -0.0013887316
        %v208 = vmul.f32 %v182, %v206
        %v209 = vmul.f32 %v183, %v207
        %v210 = vadd.f32 %v208, 0.041666646
        %v211 = vadd.f32 %v209, 0.041666646
        %v212 = vmul.f32 %v202, %v210
        %v213 = vmul.f32 %v203, %v211
        %v214 = vadd.f32 %v200, %v212
        %v215 = vadd.f32 %v201, %v213
        %v216 = vcvt.f32.s32.ties.to.even %v166
        %v217 = vcvt.f32.s32.ties.to.even %v167
        %v218 = vand.u32 %v216, 3
        %v219 = vand.u32 %v217, 3
        %v220 = vand.u32 %v218, 1
        %v221 = vand.u32 %v219, 1
        %vm222 = vcmp.eq.s32.totalorder %v220, 1
        %vm223 = vcmp.eq.s32.totalorder %v221, 1
        %v224 = vsel %vm222, %v214, %v196
        %v225 = vsel %vm223, %v215, %v197
        %v226 = vsel %vm222, %v196, %v214
        %v227 = vsel %vm223, %v197, %v215
        %v228 = vand.u32 %v218, 2
        %v229 = vand.u32 %v219, 2
        %vm230 = vcmp.eq.s32.totalorder %v228, 2
        %vm231 = vcmp.eq.s32.totalorder %v229, 2
        %v232 = vsub.f32 0.0, %v224
        %v233 = vsub.f32 0.0, %v225
        %v234 = vsel %vm230, %v232, %v224
        %v235 = vsel %vm231, %v233, %v225
        %v236 = vadd.s32 %v218, 1
        %v237 = vadd.s32 %v219, 1
        %v238 = vand.u32 %v236, 2
        %v239 = vand.u32 %v237, 2
        %vm240 = vcmp.eq.s32.totalorder %v238, 2
        %vm241 = vcmp.eq.s32.totalorder %v239, 2
        %v242 = vsub.f32 0.0, %v226
        %v243 = vsub.f32 0.0, %v227
        %v244 = vsel %vm240, %v242, %v226
        %v245 = vsel %vm241, %v243, %v227
        %246 = vst [vmem:[%s137] sm:$0xff] %v234
        %247 = vst [vmem:[%s137 + $0x10] sm:$0xff] %v235
        %248 = vst [vmem:[%s137 + $0x8] sm:$0xff] %v244
        %249 = vst [vmem:[%s137 + $0x18] sm:$0xff] %v245
        %s250 = sand.u32 %s71, 1
        %s251 = scalar_lea.sflag [#allocation3], %s250
        %s252 = sand.u32 %s71, 1
        %s253 = smul.addr %s252, 32
        %s254 = scalar_lea.vmem [#allocation2], %s253
        // Predicated region
        $region29: #{tpu_custom_call.1} parent=27 // pred_check
          %p255 = pneg %p81
        $region30: #{tpu_custom_call.1} parent=27 // pred_check_branch
          %257 = sbr.rel (%p255) target = $region32
        $region31: #{tpu_custom_call.1} parent=27 // pred_region
          %s258 = smul.u32 2, %s16
          %s260 = ssub.s32 512, 512
          %261 = vsyncadd %s251, %s260
          %s262 = smul.addr %s258, 2
          %s263 = smul.addr %s262, 128
          %s264 = scalar_lea.hbm %s2, %s263
          %s265 = sshll.u32 %s254, 4
          %s266 = int_to_ptr.vmem [resolvable:$true] %s265
          %271 = dma.vmem_to_hbm [thread:$0]  %s266, 512, %s264, %s251, 256, 256, 16
        $region32: #{tpu_custom_call.1} parent=27 // pred_fallthru
          _
      $region28: #{tpu_custom_call.1} parent=5 // pred_fallthru
        _
      %p272 = scmp.le.s32.totalorder 2, %s11
      // Predicated region
      $region33: #{tpu_custom_call.1} parent=5 // pred_check
        %p273 = pneg %p272
      $region34: #{tpu_custom_call.1} parent=5 // pred_check_branch
        %275 = sbr.rel (%p273) target = $region36
      $region35: #{tpu_custom_call.1} parent=5 // pred_region
        %s276 = ssub.s32 %s11, 2
        // Predicated region
        $region37: #{tpu_custom_call.1} parent=35 // pred_check
          %p277 = pneg %p87
        $region38: #{tpu_custom_call.1} parent=35 // pred_check_branch
          %279 = sbr.rel (%p277) target = $region40
        $region39: #{tpu_custom_call.1} parent=35 // pred_region
          %s280 = sand.u32 %s72, 1
          %s281 = scalar_lea.sflag [#allocation3], %s280
          %s282 = sand.u32 %s72, 1
          %s283 = smul.addr %s282, 32
          %s284 = scalar_lea.vmem [#allocation2], %s283
          %285 = dma.done %s281, 512
        $region40: #{tpu_custom_call.1} parent=35 // pred_fallthru
          _
      $region36: #{tpu_custom_call.1} parent=5 // pred_fallthru
        _
    $region6: #{tpu_custom_call.1} parent=1 // loop_footer
      %s15 = sadd.s32 1, %s11
    $region7: #{tpu_custom_call.1} parent=1 // loop_footer_branch
      %10 = sbr.rel target = $region3
    $region8: #{tpu_custom_call.1} parent=1 // loop_exit
      _
    %286 = vsyncpa [#allocation3], 1
    %s287 = scalar_lea.sflag [#allocation3], 1
    %288 = vsyncpa %s287, 1

</llo_original>
